<compile_context>
chip_gen: v6e
topology: v6e:2x2x1
jax: 0.10.0
libtpu: 0.0.40
codegen_flags: <defaults>
</compile_context>

<pallas_src>
import jax
import jax.numpy as jnp
from jax.experimental import pallas as pl
from jax.experimental.pallas import tpu as pltpu

LANE = 128
MAX_WIDTH = 8192


def _binary_kernel(x_ref, o_ref):
    x = x_ref[...]
    # Binary(z) = 0 if z < 0 else 1  (matches torch.where(z < 0, 0, 1); NaN -> 1)
    o_ref[...] = jnp.logical_not(x < 0).astype(o_ref.dtype)


def _sublane_multiple(dtype) -> int:
    # f32 -> 8, bf16/f16 -> 16, int8/fp8 -> 32 rows per packed vreg.
    itemsize = jnp.dtype(dtype).itemsize
    return {4: 8, 2: 16, 1: 32}.get(itemsize, 8)


def _pick_width(n: int) -> int:
    """Largest multiple-of-128 divisor of n, capped at MAX_WIDTH (n % 128 == 0)."""
    best = LANE
    w = MAX_WIDTH
    while w >= LANE:
        if n % w == 0:
            best = w
            break
        w -= LANE
    return best


def _chip_config():
    """Returns (target_tile_bytes, vmem_limit_bytes_or_None, num_parallel_cores)."""
    kind = ""
    try:
        kind = jax.devices()[0].device_kind.lower()
    except Exception:
        pass
    if "v7" in kind or "tpu7" in kind or "7x" in kind:
        # v7x: 3.2 TB/s HBM, 64 MiB VMEM/TC (32 MiB scoped default), 2 TCs/chip.
        return 6 * 1024 * 1024, 48 * 1024 * 1024, 2
    if "v6" in kind:
        # v6e: 1.4 TB/s HBM, 128 MiB VMEM (32 MiB scoped default), 1 TC.
        return 4 * 1024 * 1024, None, 1
    if "v5" in kind and ("lite" in kind or "5e" in kind):
        # v5e: 0.82 TB/s HBM, 16 MiB scoped default, 1 TC.
        return 2 * 1024 * 1024, None, 1
    # Unknown / older generations: conservative settings that fit everywhere.
    return 2 * 1024 * 1024, None, 1


def _binary_2d(x2d: jax.Array, block_rows: int, vmem_limit) -> jax.Array:
    rows, width = x2d.shape
    grid = (pl.cdiv(rows, block_rows),)
    cp_kwargs = dict(dimension_semantics=("parallel",))
    if vmem_limit is not None:
        cp_kwargs["vmem_limit_bytes"] = vmem_limit
    return pl.pallas_call(
        _binary_kernel,
        out_shape=jax.ShapeDtypeStruct((rows, width), x2d.dtype),
        grid_spec=pltpu.PrefetchScalarGridSpec(
            num_scalar_prefetch=0,
            grid=grid,
            in_specs=[pl.BlockSpec((block_rows, width), lambda i: (i, 0))],
            out_specs=pl.BlockSpec((block_rows, width), lambda i: (i, 0)),
        ),
        compiler_params=pltpu.CompilerParams(**cp_kwargs),
    )(x2d)


def binary(z: jax.Array) -> jax.Array:
    """Applies Binary activation elementwise; output has same shape/dtype as z."""
    orig_shape = z.shape
    dtype = z.dtype
    size = z.size
    if size == 0:
        return z

    flat = z.reshape(-1)

    # Pad (only if needed) to a lane multiple; reshape of the padded flat array is free.
    pad = (-size) % LANE
    if pad:
        flat = jnp.pad(flat, (0, pad))
    padded = size + pad

    width = _pick_width(padded)
    rows = padded // width

    tile_bytes, vmem_limit, num_cores = _chip_config()
    itemsize = jnp.dtype(dtype).itemsize
    sub = _sublane_multiple(dtype)

    # Block rows from the generation-specific tile-byte budget, sublane-aligned.
    target_rows = max(sub, tile_bytes // (width * itemsize))
    block_rows = max(sub, (target_rows // sub) * sub)
    if block_rows > rows:
        block_rows = rows  # full first dim: always a legal block shape

    # On multi-TC chips ensure >= 2 grid steps so the "parallel" axis shards
    # across both TensorCores (otherwise one TC sits idle on mid-size inputs).
    if num_cores > 1 and rows >= 2 * sub:
        cap = max(sub, ((rows // 2) // sub) * sub)
        block_rows = min(block_rows, cap)

    out2d = _binary_2d(flat.reshape(rows, width), block_rows, vmem_limit)
    out_flat = out2d.reshape(-1)
    if pad:
        out_flat = out_flat[:size]
    return out_flat.reshape(orig_shape)


# TODO(synk): `inplace=True` from the PyTorch module has no functional-JAX equivalent;
# the wrapper always returns a new array (same values either way).


if __name__ == "__main__":
    key = jax.random.PRNGKey(0)

    # Small NCHW-like input (size is a multiple of 128 -> single pure kernel pass).
    x = jax.random.normal(key, (2, 4, 16, 16), dtype=jnp.float32)
    out = binary(x)
    jax.block_until_ready(out)
    ref = jnp.where(x < 0, jnp.zeros_like(x), jnp.ones_like(x))
    assert out.shape == x.shape and out.dtype == x.dtype
    assert bool(jnp.all(out == ref))

    # Ragged-size input (exercises the pad + prefix-slice path).
    x2 = jax.random.normal(jax.random.PRNGKey(0), (5, 200), dtype=jnp.float32)
    out2 = binary(x2)
    jax.block_until_ready(out2)
    ref2 = jnp.where(x2 < 0, jnp.zeros_like(x2), jnp.ones_like(x2))
    assert out2.shape == x2.shape and out2.dtype == x2.dtype
    assert bool(jnp.all(out2 == ref2))

    # Special values: NaN -> 1, -0.0 -> 1, -inf -> 0, +inf -> 1 (torch.where semantics).
    x3 = jnp.array([[jnp.nan, -0.0, 0.0, -jnp.inf, jnp.inf, -1.0, 1.0, 2.5]] * 16,
                   dtype=jnp.float32)
    out3 = binary(x3)
    jax.block_until_ready(out3)
    ref3 = jnp.where(x3 < 0, jnp.zeros_like(x3), jnp.ones_like(x3))
    assert bool(jnp.all(out3 == ref3))

    print("KERNEL_OK")
</pallas_src>

<mosaic_0001>
module attributes {stable_mosaic.version = 11 : i64} {
  func.func @_binary_kernel(%arg0: i32, %arg1: memref<1x2048xf32, #tpu.memory_space<vmem>>, %arg2: memref<1x2048xf32, #tpu.memory_space<vmem>>) attributes {dimension_semantics = [#tpu.dimension_semantics<parallel>], iteration_bounds = array<i64: 1>, scalar_prefetch = 0 : i64, scratch_operands = 0 : i64, tpu.core_type = #tpu.core_type<tc>, window_params = [{transform_indices = @transform_0, window_bounds = array<i64: 1, 2048>}, {transform_indices = @transform_1, window_bounds = array<i64: 1, 2048>}]} {
    %c0 = arith.constant 0 : index
    %c0_0 = arith.constant 0 : index
    %0 = vector.load %arg1[%c0, %c0_0] : memref<1x2048xf32, #tpu.memory_space<vmem>>, vector<1x2048xf32>
    %cst = arith.constant 0.000000e+00 : f32
    %1 = vector.broadcast %cst : f32 to vector<1x2048xf32>
    %2 = arith.cmpf olt, %0, %1 : vector<1x2048xf32>
    %cst_1 = arith.constant dense<true> : vector<1x2048xi1>
    %3 = arith.xori %2, %cst_1 : vector<1x2048xi1>
    %4 = arith.extui %3 : vector<1x2048xi1> to vector<1x2048xi32>
    %5 = arith.sitofp %4 : vector<1x2048xi32> to vector<1x2048xf32>
    %c0_2 = arith.constant 0 : index
    %c0_3 = arith.constant 0 : index
    %6 = vector.load %arg2[%c0_2, %c0_3] : memref<1x2048xf32, #tpu.memory_space<vmem>>, vector<1x2048xf32>
    tpu.vector_store %arg2[%c0_2, %c0_3], %5 {strides = array<i32>} : memref<1x2048xf32, #tpu.memory_space<vmem>>, vector<1x2048xf32>,
    return
  }
  func.func @transform_0(%arg0: i32) -> (i32, i32) {
    %c0_i32 = arith.constant 0 : i32
    %c0_i32_0 = arith.constant 0 : i32
    return %arg0, %c0_i32 : i32, i32
  }
  func.func @transform_1(%arg0: i32) -> (i32, i32) {
    %c0_i32 = arith.constant 0 : i32
    %c0_i32_0 = arith.constant 0 : i32
    return %arg0, %c0_i32 : i32, i32
  }
}

</mosaic_0001>

<llo_original>
// kernel: tpu_custom_call.1
$region0: #{tpu_custom_call.1}
  #allocation0 [shape = 'u32[]', space=smem, size = 0x4, offset = 0x4, fixed_abs, tag = 'smem constant byte address 0x4 - core index']
  #allocation1 [shape = 'u32[144,128]{1,0:T(1,128)}', space=vmem, size = 0x12000, scoped, tag = 'internal scratch']
  %s0 = inlined_call_operand.hbm [shape: f32[1,2048], index: 0, kind: input, shape index: {}]
  %s1 = inlined_call_operand.hbm [shape: f32[1,2048], index: 1, kind: output, shape index: {}]
  %s2 = sld [smem:[#allocation0]]
  $region18: #{tpu_custom_call.1} parent=0
    _
  %s4 = ssub.s32 1, %s2
  %s5 = scalar_select 0, %s4, %s2
  $region1: #{tpu_custom_call.1} parent=0
    #allocation2 [shape = 'u8[8192]{0}', space=vmem, size = 0x2000, scoped, tag = 'input window, operand 0, single buffered']
    #allocation3 [shape = 's32[1]{0}', space=sflag, size = 0x4, scoped, tag = 'scoped memory for tpu_custom_call.1']
    #allocation4 [shape = 's32[1]{0}', space=sflag, size = 0x4, scoped, tag = 'scoped memory for tpu_custom_call.1']
    #allocation5 [shape = 'u8[8192]{0}', space=vmem, size = 0x2000, scoped, tag = 'output window, operand 0, single buffered']
    %6 = vsyncpa [#allocation3], 0
    %7 = vsyncpa [#allocation4], 0
    // Predicated region
    $region2: #{tpu_custom_call.1} parent=1 // pred_check
      _
    $region3: #{tpu_custom_call.1} parent=1 // pred_check_branch
      %9 = sbr.rel (0) target = $region5
    $region4: #{tpu_custom_call.1} parent=1 // pred_region
      %s11 = ssub.s32 256, 256
      %12 = vsyncadd [#allocation3], %s11
      %s14 = sshll.u32 [#allocation2], 4
      %s15 = int_to_ptr.vmem [resolvable:$true] %s14
      %17 = dma.hbm_to_vmem [thread:$0]  %s0, 256, %s15, [#allocation3]
    $region5: #{tpu_custom_call.1} parent=1 // pred_fallthru
      _
    // Predicated region
    $region6: #{tpu_custom_call.1} parent=1 // pred_check
      _
    $region7: #{tpu_custom_call.1} parent=1 // pred_check_branch
      %19 = sbr.rel (0) target = $region9
    $region8: #{tpu_custom_call.1} parent=1 // pred_region
      %20 = dma.done [#allocation3], 256
    $region9: #{tpu_custom_call.1} parent=1 // pred_fallthru
      _
    %v21 = vld [vmem:[#allocation2] sm:$0xff]
    %v22 = vld [vmem:[#allocation2 + $0x8] sm:$0xff]
    %vm23 = vcmp.lt.f32.partialorder %v21, 0.0
    %vm24 = vcmp.lt.f32.partialorder %v22, 0.0
    %vm25 = vmxor %vm23, 1
    %vm26 = vmxor %vm24, 1
    %v27 = vsel %vm25, 1, 0
    %v28 = vsel %vm26, 1, 0
    %v29 = vcvt.s32.f32 %v27
    %v30 = vcvt.s32.f32 %v28
    %31 = vst [vmem:[#allocation5] sm:$0xff] %v29
    %32 = vst [vmem:[#allocation5 + $0x8] sm:$0xff] %v30
    // Predicated region
    $region10: #{tpu_custom_call.1} parent=1 // pred_check
      _
    $region11: #{tpu_custom_call.1} parent=1 // pred_check_branch
      %34 = sbr.rel (0) target = $region13
    $region12: #{tpu_custom_call.1} parent=1 // pred_region
      %s36 = ssub.s32 256, 256
      %37 = vsyncadd [#allocation4], %s36
      %s39 = sshll.u32 [#allocation5], 4
      %s40 = int_to_ptr.vmem [resolvable:$true] %s39
      %42 = dma.vmem_to_hbm [thread:$0]  %s40, 256, %s1, [#allocation4]
    $region13: #{tpu_custom_call.1} parent=1 // pred_fallthru
      _
    // Predicated region
    $region14: #{tpu_custom_call.1} parent=1 // pred_check
      _
    $region15: #{tpu_custom_call.1} parent=1 // pred_check_branch
      %44 = sbr.rel (0) target = $region17
    $region16: #{tpu_custom_call.1} parent=1 // pred_region
      %45 = dma.done [#allocation4], 256
    $region17: #{tpu_custom_call.1} parent=1 // pred_fallthru
      _
    %46 = vsyncpa [#allocation3], 1
    %47 = vsyncpa [#allocation4], 1

</llo_original>
